<compile_context>
chip_gen: v7x
topology: tpu7x:2x2x1
jax: 0.10.0
libtpu: 0.0.40
codegen_flags: <defaults>
</compile_context>

<pallas_src>
import jax
import jax.numpy as jnp
from jax.experimental import pallas as pl
from jax.experimental.pallas import tpu as pltpu

_LANE = 128
_SUBLANE = 8


def mlp_kernel(x_ref, w1_ref, b1_ref, w2_ref, b2_ref, o_ref):
    # x_ref:  (tb, input_dim)            VMEM batch tile
    # w1_ref: (input_dim, hidden_dim)    VMEM (same block every grid step -> resident)
    # b1_ref: (1, hidden_dim)            VMEM
    # w2_ref: (1, hidden_dim)            VMEM (fc2 weight as a row)
    # b2_ref: (1,)                       SMEM (fc2 bias scalar)
    # o_ref:  (1, tb)                    VMEM (lane-dense output row)
    h = jnp.dot(
        x_ref[...], w1_ref[...],
        preferred_element_type=jnp.float32,
        precision=jax.lax.Precision.HIGHEST,
    )
    h = jnp.maximum(h + b1_ref[...], 0.0)  # bias + ReLU (VPU)
    # fc2 with a single output feature: contract h's hidden dim against the (1, hidden) weight
    # row so the result lands directly as a lane-dense (1, tb) row (no sublane->lane relayout,
    # unmasked vst on write-back).
    out = jax.lax.dot_general(
        w2_ref[...], h,
        dimension_numbers=(((1,), (1,)), ((), ())),
        preferred_element_type=jnp.float32,
        precision=jax.lax.Precision.HIGHEST,
    )  # (1, tb)
    o_ref[...] = (out + b2_ref[0]).astype(o_ref.dtype)


def _round_up(x, m):
    return ((x + m - 1) // m) * m


def _tpu_generation():
    """Best-effort TPU generation query -> (has_two_tensorcores, vmem_limit_bytes)."""
    kind = ""
    try:
        kind = getattr(jax.devices()[0], "device_kind", "").lower()
    except Exception:
        pass
    if "v7" in kind:
        # 2 TensorCores/chip, 64 MiB physical VMEM per core -> leave headroom.
        return True, 48 * 1024 * 1024
    if "v6" in kind:
        return False, 80 * 1024 * 1024      # 128 MiB physical
    if "v5" in kind or "v4" in kind:
        return False, 64 * 1024 * 1024      # 128 MiB physical
    return False, 48 * 1024 * 1024          # unknown: conservative


def _choose_tile_batch(B, input_dim, tile_batch, two_tc, vmem_limit_bytes):
    """Pick the batch tile (rows per grid step).

    VMEM budgeting uses the *lane-padded* footprint: a (tb, input_dim) f32 block pads its lane
    dim up to 128 (4x raw for input_dim=32) and is double-buffered by the auto pipeline; the
    (1, tb) output block sublane-pads 1 -> 8 and is also double-buffered.  ~1/3 of the VMEM
    limit is reserved for the resident weight blocks and compiler scratch.
    """
    x_row_bytes = _round_up(max(input_dim, 1), _LANE) * 4
    out_row_bytes = _SUBLANE * 4
    bytes_per_row = 2 * (x_row_bytes + out_row_bytes)        # double-buffered
    budget = (2 * vmem_limit_bytes) // 3
    max_tb = max(_LANE, (budget // bytes_per_row) // _LANE * _LANE)

    tb = min(tile_batch, max_tb)
    if two_tc and B >= 2 * 1024:
        # v7x only: give each TensorCore at least one tile of the 'parallel' batch axis.
        tb = min(tb, _round_up(pl.cdiv(B, 2), _LANE))
    if B <= tb:
        return B          # single full-extent block (block shape == array shape)
    return max(_LANE, (tb // _LANE) * _LANE)


def neural_network_forward(x, w1, b1, w2, b2, *, tile_batch=32768):
    """Forward pass: ReLU(x @ w1 + b1) @ w2 + b2.

    x:  (B, input_dim) float32
    w1: (input_dim, hidden_dim), b1: (hidden_dim,)
    w2: (hidden_dim, 1),         b2: (1,)
    returns: (B, 1) float32
    """
    B, input_dim = x.shape
    hidden_dim = w1.shape[1]

    b1_row = b1.reshape(1, hidden_dim)
    w2_row = w2.reshape(1, hidden_dim)   # (hidden_dim, 1) -> (1, hidden_dim)
    b2_s = b2.reshape(1)

    two_tc, vmem_limit = _tpu_generation()
    tb = _choose_tile_batch(B, input_dim, tile_batch, two_tc, vmem_limit)
    grid = (pl.cdiv(B, tb),)

    param_bytes = (input_dim * hidden_dim + 2 * hidden_dim + 1) * 4
    cost = pl.CostEstimate(
        flops=2 * B * hidden_dim * (input_dim + 1),
        transcendentals=0,
        bytes_accessed=B * input_dim * 4 + B * 4 + param_bytes,
    )

    out_row = pl.pallas_call(
        mlp_kernel,
        out_shape=jax.ShapeDtypeStruct((1, B), jnp.float32),
        grid_spec=pltpu.PrefetchScalarGridSpec(
            num_scalar_prefetch=0,
            grid=grid,
            in_specs=[
                pl.BlockSpec((tb, input_dim), lambda i: (i, 0)),           # x batch tile
                pl.BlockSpec((input_dim, hidden_dim), lambda i: (0, 0)),   # w1 (full, resident)
                pl.BlockSpec((1, hidden_dim), lambda i: (0, 0)),           # b1 row
                pl.BlockSpec((1, hidden_dim), lambda i: (0, 0)),           # w2 row
                pl.BlockSpec(memory_space=pltpu.MemorySpace.SMEM),         # b2 scalar in SMEM
            ],
            out_specs=pl.BlockSpec((1, tb), lambda i: (0, i)),             # lane-dense output row
        ),
        compiler_params=pltpu.CompilerParams(
            dimension_semantics=("parallel",),
            vmem_limit_bytes=vmem_limit,
        ),
        cost_estimate=cost,
    )(x, w1, b1_row, w2_row, b2_s)

    # (1, B) -> (B, 1): free layout plumbing in the wrapper.
    return out_row.reshape(B, 1)


def init_params(key, input_dim, hidden_dim=16):
    """Deterministic parameter init mirroring nn.Linear shapes (stored transposed)."""
    k1, k2, k3, k4 = jax.random.split(key, 4)
    bound1 = 1.0 / jnp.sqrt(input_dim)
    bound2 = 1.0 / jnp.sqrt(hidden_dim)
    w1 = jax.random.uniform(k1, (input_dim, hidden_dim), jnp.float32, -bound1, bound1)
    b1 = jax.random.uniform(k2, (hidden_dim,), jnp.float32, -bound1, bound1)
    w2 = jax.random.uniform(k3, (hidden_dim, 1), jnp.float32, -bound2, bound2)
    b2 = jax.random.uniform(k4, (1,), jnp.float32, -bound2, bound2)
    return w1, b1, w2, b2


def _reference(x, w1, b1, w2, b2):
    hp = jax.lax.Precision.HIGHEST
    h = jnp.maximum(jnp.dot(x, w1, precision=hp) + b1, 0.0)
    return jnp.dot(h, w2, precision=hp) + b2


if __name__ == "__main__":
    key = jax.random.PRNGKey(0)
    k_x, k_p, k_x2, k_x3 = jax.random.split(key, 4)

    batch, input_dim, hidden_dim = 8, 32, 16
    x = jax.random.normal(k_x, (batch, input_dim), jnp.float32)
    w1, b1, w2, b2 = init_params(k_p, input_dim, hidden_dim)

    out = jax.block_until_ready(neural_network_forward(x, w1, b1, w2, b2))
    ref = _reference(x, w1, b1, w2, b2)
    assert out.shape == (batch, 1)
    assert jnp.allclose(out, ref, atol=1e-5, rtol=1e-5)

    # Multi-tile, lane-dense tiled output path (grid = 3, 128-row tiles).
    batch2 = 384
    x2 = jax.random.normal(k_x2, (batch2, input_dim), jnp.float32)
    out2 = jax.block_until_ready(neural_network_forward(x2, w1, b1, w2, b2, tile_batch=128))
    assert out2.shape == (batch2, 1)
    assert jnp.allclose(out2, _reference(x2, w1, b1, w2, b2), atol=1e-5, rtol=1e-5)

    # Partial last tile (B=200 with 128-row tiles): padded rows are masked on write-back.
    batch3 = 200
    x3 = jax.random.normal(k_x3, (batch3, input_dim), jnp.float32)
    out3 = jax.block_until_ready(neural_network_forward(x3, w1, b1, w2, b2, tile_batch=128))
    assert out3.shape == (batch3, 1)
    assert jnp.allclose(out3, _reference(x3, w1, b1, w2, b2), atol=1e-5, rtol=1e-5)

    print("KERNEL_OK")
</pallas_src>

<mosaic_0001>
module attributes {stable_mosaic.version = 11 : i64} {
  func.func @mlp_kernel(%arg0: i32, %arg1: memref<8x32xf32, #tpu.memory_space<vmem>>, %arg2: memref<32x16xf32, #tpu.memory_space<vmem>>, %arg3: memref<1x16xf32, #tpu.memory_space<vmem>>, %arg4: memref<1x16xf32, #tpu.memory_space<vmem>>, %arg5: memref<1xf32, #tpu.memory_space<smem>>, %arg6: memref<1x8xf32, #tpu.memory_space<vmem>>) attributes {dimension_semantics = [#tpu.dimension_semantics<parallel>], iteration_bounds = array<i64: 1>, scalar_prefetch = 0 : i64, scratch_operands = 0 : i64, tpu.core_type = #tpu.core_type<tc>, window_params = [{transform_indices = @transform_0, window_bounds = array<i64: 8, 32>}, {pipeline_mode = #tpu.pipeline_mode<synchronous>, transform_indices = @transform_1, window_bounds = array<i64: 32, 16>}, {pipeline_mode = #tpu.pipeline_mode<synchronous>, transform_indices = @transform_2, window_bounds = array<i64: 1, 16>}, {pipeline_mode = #tpu.pipeline_mode<synchronous>, transform_indices = @transform_3, window_bounds = array<i64: 1, 16>}, {transform_indices = @transform_4, window_bounds = array<i64: 1>}, {transform_indices = @transform_5, window_bounds = array<i64: 1, 8>}]} {
    %c0 = arith.constant 0 : index
    %c0_0 = arith.constant 0 : index
    %0 = vector.load %arg1[%c0, %c0_0] : memref<8x32xf32, #tpu.memory_space<vmem>>, vector<8x32xf32>
    %c0_1 = arith.constant 0 : index
    %c0_2 = arith.constant 0 : index
    %1 = vector.load %arg2[%c0_1, %c0_2] : memref<32x16xf32, #tpu.memory_space<vmem>>, vector<32x16xf32>
    %cst = arith.constant dense<0.000000e+00> : vector<8x16xf32>
    %2 = tpu.matmul %0, %1, %cst {dimension_numbers = #tpu.dot_dimension_numbers<[1], [0], [0], [1], [0, 0, 1, 1], [], []>, precision = #tpu.contract_precision<fp32>} : vector<8x32xf32>, vector<32x16xf32>, vector<8x16xf32> -> vector<8x16xf32>
    %c0_3 = arith.constant 0 : index
    %c0_4 = arith.constant 0 : index
    %3 = vector.load %arg3[%c0_3, %c0_4] : memref<1x16xf32, #tpu.memory_space<vmem>>, vector<1x16xf32>
    %4 = vector.broadcast %3 : vector<1x16xf32> to vector<8x16xf32>
    %5 = arith.addf %2, %4 : vector<8x16xf32>
    %cst_5 = arith.constant 0.000000e+00 : f32
    %6 = vector.broadcast %cst_5 : f32 to vector<8x16xf32>
    %7 = arith.maximumf %5, %6 : vector<8x16xf32>
    %c0_6 = arith.constant 0 : index
    %c0_7 = arith.constant 0 : index
    %8 = vector.load %arg4[%c0_6, %c0_7] : memref<1x16xf32, #tpu.memory_space<vmem>>, vector<1x16xf32>
    %cst_8 = arith.constant dense<0.000000e+00> : vector<1x8xf32>
    %9 = tpu.matmul %8, %7, %cst_8 {dimension_numbers = #tpu.dot_dimension_numbers<[1], [1], [0], [0], [0, 0, 1, 0], [], []>, precision = #tpu.contract_precision<fp32>} : vector<1x16xf32>, vector<8x16xf32>, vector<1x8xf32> -> vector<1x8xf32>
    %c0_9 = arith.constant 0 : index
    %10 = memref.load %arg5[%c0_9] : memref<1xf32, #tpu.memory_space<smem>>
    %11 = vector.broadcast %10 : f32 to vector<1x8xf32>
    %12 = arith.addf %9, %11 : vector<1x8xf32>
    %c0_10 = arith.constant 0 : index
    %c0_11 = arith.constant 0 : index
    %13 = vector.load %arg6[%c0_10, %c0_11] : memref<1x8xf32, #tpu.memory_space<vmem>>, vector<1x8xf32>
    tpu.vector_store %arg6[%c0_10, %c0_11], %12 {strides = array<i32>} : memref<1x8xf32, #tpu.memory_space<vmem>>, vector<1x8xf32>,
    return
  }
  func.func @transform_0(%arg0: i32) -> (i32, i32) {
    %c0_i32 = arith.constant 0 : i32
    %c0_i32_0 = arith.constant 0 : i32
    return %arg0, %c0_i32 : i32, i32
  }
  func.func @transform_1(%arg0: i32) -> (i32, i32) {
    %c0_i32 = arith.constant 0 : i32
    %c0_i32_0 = arith.constant 0 : i32
    %c0_i32_1 = arith.constant 0 : i32
    return %c0_i32, %c0_i32_0 : i32, i32
  }
  func.func @transform_2(%arg0: i32) -> (i32, i32) {
    %c0_i32 = arith.constant 0 : i32
    %c0_i32_0 = arith.constant 0 : i32
    %c0_i32_1 = arith.constant 0 : i32
    return %c0_i32, %c0_i32_0 : i32, i32
  }
  func.func @transform_3(%arg0: i32) -> (i32, i32) {
    %c0_i32 = arith.constant 0 : i32
    %c0_i32_0 = arith.constant 0 : i32
    %c0_i32_1 = arith.constant 0 : i32
    return %c0_i32, %c0_i32_0 : i32, i32
  }
  func.func @transform_4(%arg0: i32) -> i32 {
    %c0_i32 = arith.constant 0 : i32
    %c0_i32_0 = arith.constant 0 : i32
    return %c0_i32 : i32
  }
  func.func @transform_5(%arg0: i32) -> (i32, i32) {
    %c0_i32 = arith.constant 0 : i32
    %c0_i32_0 = arith.constant 0 : i32
    return %c0_i32, %arg0 : i32, i32
  }
}

</mosaic_0001>

<llo_original>
// kernel: tpu_custom_call.1
$region0: #{tpu_custom_call.1}
  #allocation0 [shape = 'u32[]', space=smem, size = 0x4, offset = 0x4, fixed_abs, tag = 'smem constant byte address 0x4 - core index']
  #allocation1 [shape = 'u32[144,128]{1,0:T(1,128)}', space=vmem, size = 0x12000, scoped, tag = 'internal scratch']
  #allocation2 [shape = 'f32[1]{0:T(128)S(6)}', space=smem, size = 0x200, scoped, tag = 'scoped memory for tpu_custom_call.1']
  %s0 = inlined_call_operand.vmem [shape: f32[8,32], index: 0, kind: input, shape index: {}]
  %s1 = inlined_call_operand.vmem [shape: f32[32,16], index: 1, kind: input, shape index: {}]
  %s2 = inlined_call_operand.vmem [shape: f32[1,16], index: 2, kind: input, shape index: {}]
  %s3 = inlined_call_operand.vmem [shape: f32[1,16], index: 3, kind: input, shape index: {}]
  %s4 = inlined_call_operand.<no memory space> [shape: f32[1], index: 4, kind: input, shape index: {}]
  %s5 = inlined_call_operand.hbm [shape: f32[1,8], index: 5, kind: output, shape index: {}]
  %s6 = sld [smem:[#allocation0]]
  $region30: #{tpu_custom_call.1} parent=0
    _
  %s8 = ssub.s32 1, %s6
  %s9 = scalar_select 0, %s8, %s6
  %10 = sst [smem:[#allocation2]] %s4
  $region1: #{tpu_custom_call.1} parent=0
    #allocation3 [shape = 'u8[512]{0}', space=vmem, size = 0x400, scoped, tag = 'output window, operand 0, single buffered']
    #allocation4 [shape = 's32[1]{0}', space=sflag, size = 0x4, scoped, tag = 'scoped memory for tpu_custom_call.1']
    %11 = vsyncpa [#allocation4], 0
    // Predicated region
    $region2: #{tpu_custom_call.1} parent=1 // pred_check
      _
    $region3: #{tpu_custom_call.1} parent=1 // pred_check_branch
      %13 = sbr.rel (0) target = $region5
    $region4: #{tpu_custom_call.1} parent=1 // pred_region
      _
    $region5: #{tpu_custom_call.1} parent=1 // pred_fallthru
      _
    // Predicated region
    $region6: #{tpu_custom_call.1} parent=1 // pred_check
      _
    $region7: #{tpu_custom_call.1} parent=1 // pred_check_branch
      %15 = sbr.rel (0) target = $region9
    $region8: #{tpu_custom_call.1} parent=1 // pred_region
      _
    $region9: #{tpu_custom_call.1} parent=1 // pred_fallthru
      _
    // Predicated region
    $region10: #{tpu_custom_call.1} parent=1 // pred_check
      _
    $region11: #{tpu_custom_call.1} parent=1 // pred_check_branch
      %17 = sbr.rel (0) target = $region13
    $region12: #{tpu_custom_call.1} parent=1 // pred_region
      _
    $region13: #{tpu_custom_call.1} parent=1 // pred_fallthru
      _
    // Predicated region
    $region14: #{tpu_custom_call.1} parent=1 // pred_check
      _
    $region15: #{tpu_custom_call.1} parent=1 // pred_check_branch
      %19 = sbr.rel (0) target = $region17
    $region16: #{tpu_custom_call.1} parent=1 // pred_region
      _
    $region17: #{tpu_custom_call.1} parent=1 // pred_fallthru
      _
    // Predicated region
    $region18: #{tpu_custom_call.1} parent=1 // pred_check
      _
    $region19: #{tpu_custom_call.1} parent=1 // pred_check_branch
      %21 = sbr.rel (0) target = $region21
    $region20: #{tpu_custom_call.1} parent=1 // pred_region
      _
    $region21: #{tpu_custom_call.1} parent=1 // pred_fallthru
      _
    %v22 = vld [vmem:[%s0] sm:$0xff]
    %v23 = vld [vmem:[%s1] sm:$0xff]
    %v24 = vld [vmem:[%s1 + $0x8] sm:$0xff]
    %v25 = vld [vmem:[%s1 + $0x10] sm:$0xff]
    %v26 = vld [vmem:[%s1 + $0x18] sm:$0xff]
    %v27 = vld [vmem:[%s2] sm:$0x1]
    %v29 = vlaneseq
    %v30 = vshrl.u32 %v29, 7
    %v31 = vsub.s32 0, %v30
    %v32 = vrot.slane %v27, %v31
    %vm34 = vcmask 261120
    %v36 = vsel %vm34, %v22, 0
    %38 = vmatprep.subr.mxu0 0.0
    %v39 = vand.u32 %v23, 4294901760
    %40 = vmatpush1.msra.mxu0 %v39
    %41 = vmatprep.subr.mxu0 0.0
    %v42 = vand.u32 %v24, 4294901760
    %43 = vmatpush1.msra.mxu0 %v42
    %44 = vmatprep.subr.mxu0 0.0
    %v45 = vand.u32 %v25, 4294901760
    %46 = vmatpush1.msra.mxu0 %v45
    %47 = vmatprep.subr.mxu0 0.0
    %v48 = vand.u32 %v26, 4294901760
    %49 = vmatpush1.msra.mxu0 %v48
    %50 = vmatprep.subr.mxu0 0.0
    %51 = vmatpush1.msra.mxu0 0.0
    %52 = vmatprep.subr.mxu0 0.0
    %53 = vmatpush1.msra.mxu0 0.0
    %54 = vmatprep.subr.mxu0 0.0
    %55 = vmatpush1.msra.mxu0 0.0
    %56 = vmatprep.subr.mxu0 0.0
    %57 = vmatpush1.msra.mxu0 0.0
    %58 = vmatprep.subr.mxu0 0.0
    %59 = vmatpush1.msra.mxu0 0.0
    %60 = vmatprep.subr.mxu0 0.0
    %61 = vmatpush1.msra.mxu0 0.0
    %62 = vmatprep.subr.mxu0 0.0
    %63 = vmatpush1.msra.mxu0 0.0
    %64 = vmatprep.subr.mxu0 0.0
    %65 = vmatpush1.msra.mxu0 0.0
    %66 = vmatprep.subr.mxu0 0.0
    %67 = vmatpush1.msra.mxu0 0.0
    %68 = vmatprep.subr.mxu0 0.0
    %69 = vmatpush1.msra.mxu0 0.0
    %70 = vmatprep.subr.mxu0 0.0
    %71 = vmatpush1.msra.mxu0 0.0
    %72 = vmatprep.subr.mxu0 0.0
    %73 = vmatpush1.msra.mxu0 0.0
    %74 = vmatprep.subr.mxu0 0.0
    %75 = vmatpush1.msra.mxu0 0.0
    %76 = vmatprep.subr.mxu0 0.0
    %77 = vmatpush1.msra.mxu0 0.0
    %78 = vmatprep.subr.mxu0 0.0
    %79 = vmatpush1.msra.mxu0 0.0
    %80 = vmatprep.subr.mxu0 0.0
    %81 = vmatpush1.msra.mxu0 0.0
    %82 = vmatprep.subr.mxu0 0.0
    %83 = vmatpush1.msra.mxu0 0.0
    %84 = vmatprep.subr.mxu0 0.0
    %85 = vmatpush1.msra.mxu0 0.0
    %86 = vmatprep.subr.mxu0 0.0
    %87 = vmatpush1.msra.mxu0 0.0
    %88 = vmatprep.subr.mxu0 0.0
    %89 = vmatpush1.msra.mxu0 0.0
    %90 = vmatprep.subr.mxu0 0.0
    %91 = vmatpush1.msra.mxu0 0.0
    %92 = vmatprep.subr.mxu0 0.0
    %93 = vmatpush1.msra.mxu0 0.0
    %94 = vmatprep.subr.mxu0 0.0
    %95 = vmatpush1.msra.mxu0 0.0
    %96 = vmatprep.subr.mxu0 0.0
    %97 = vmatpush1.msra.mxu0 0.0
    %98 = vmatprep.subr.mxu0 0.0
    %99 = vmatpush1.msra.mxu0 0.0
    %100 = vmatprep.subr.mxu0 0.0
    %101 = vmatpush1.msra.mxu0 0.0
    %102 = vmatprep.subr.mxu0 0.0
    %103 = vmatpush1.msra.mxu0 0.0
    %104 = vmatprep.subr.mxu0 0.0
    %105 = vmatpush1.msra.mxu0 0.0
    %106 = vmatprep.mubr.f32.mxu0 0.0
    %v107 = vand.u32 %v36, 4294901760
    %v108 = vsub.f32 %v36, %v107
    %v109 = vand.u32 %v108, 4294901760
    %v110 = vsub.f32 %v108, %v109
    %v111 = vand.u32 %v110, 4294901760
    %112 = vmatmul.mubr.f32.gmra.mrb[0].mxu0 %v111
    %v113 = vpop.f32.mrb[0].mxu0
    %v114 = vadd.f32 %v32, %v113
    %v115 = vpop.f32.mrb[0].mxu0
    %116 = vdwg.mxu0
    %117 = vmatprep.subr.mxu0 0.0
    %v118 = vand.u32 %v23, 4294901760
    %v119 = vsub.f32 %v23, %v118
    %v120 = vand.u32 %v119, 4294901760
    %v121 = vsub.f32 %v119, %v120
    %v122 = vand.u32 %v121, 4294901760
    %123 = vmatpush1.msra.mxu0 %v122
    %124 = vmatprep.subr.mxu0 0.0
    %v125 = vand.u32 %v24, 4294901760
    %v126 = vsub.f32 %v24, %v125
    %v127 = vand.u32 %v126, 4294901760
    %v128 = vsub.f32 %v126, %v127
    %v129 = vand.u32 %v128, 4294901760
    %130 = vmatpush1.msra.mxu0 %v129
    %131 = vmatprep.subr.mxu0 0.0
    %v132 = vand.u32 %v25, 4294901760
    %v133 = vsub.f32 %v25, %v132
    %v134 = vand.u32 %v133, 4294901760
    %v135 = vsub.f32 %v133, %v134
    %v136 = vand.u32 %v135, 4294901760
    %137 = vmatpush1.msra.mxu0 %v136
    %138 = vmatprep.subr.mxu0 0.0
    %v139 = vand.u32 %v26, 4294901760
    %v140 = vsub.f32 %v26, %v139
    %v141 = vand.u32 %v140, 4294901760
    %v142 = vsub.f32 %v140, %v141
    %v143 = vand.u32 %v142, 4294901760
    %144 = vmatpush1.msra.mxu0 %v143
    %145 = vmatprep.subr.mxu0 0.0
    %146 = vmatpush1.msra.mxu0 0.0
    %147 = vmatprep.subr.mxu0 0.0
    %148 = vmatpush1.msra.mxu0 0.0
    %149 = vmatprep.subr.mxu0 0.0
    %150 = vmatpush1.msra.mxu0 0.0
    %151 = vmatprep.subr.mxu0 0.0
    %152 = vmatpush1.msra.mxu0 0.0
    %153 = vmatprep.subr.mxu0 0.0
    %154 = vmatpush1.msra.mxu0 0.0
    %155 = vmatprep.subr.mxu0 0.0
    %156 = vmatpush1.msra.mxu0 0.0
    %157 = vmatprep.subr.mxu0 0.0
    %158 = vmatpush1.msra.mxu0 0.0
    %159 = vmatprep.subr.mxu0 0.0
    %160 = vmatpush1.msra.mxu0 0.0
    %161 = vmatprep.subr.mxu0 0.0
    %162 = vmatpush1.msra.mxu0 0.0
    %163 = vmatprep.subr.mxu0 0.0
    %164 = vmatpush1.msra.mxu0 0.0
    %165 = vmatprep.subr.mxu0 0.0
    %166 = vmatpush1.msra.mxu0 0.0
    %167 = vmatprep.subr.mxu0 0.0
    %168 = vmatpush1.msra.mxu0 0.0
    %169 = vmatprep.subr.mxu0 0.0
    %170 = vmatpush1.msra.mxu0 0.0
    %171 = vmatprep.subr.mxu0 0.0
    %172 = vmatpush1.msra.mxu0 0.0
    %173 = vmatprep.subr.mxu0 0.0
    %174 = vmatpush1.msra.mxu0 0.0
    %175 = vmatprep.subr.mxu0 0.0
    %176 = vmatpush1.msra.mxu0 0.0
    %177 = vmatprep.subr.mxu0 0.0
    %178 = vmatpush1.msra.mxu0 0.0
    %179 = vmatprep.subr.mxu0 0.0
    %180 = vmatpush1.msra.mxu0 0.0
    %181 = vmatprep.subr.mxu0 0.0
    %182 = vmatpush1.msra.mxu0 0.0
    %183 = vmatprep.subr.mxu0 0.0
    %184 = vmatpush1.msra.mxu0 0.0
    %185 = vmatprep.subr.mxu0 0.0
    %186 = vmatpush1.msra.mxu0 0.0
    %187 = vmatprep.subr.mxu0 0.0
    %188 = vmatpush1.msra.mxu0 0.0
    %189 = vmatprep.subr.mxu0 0.0
    %190 = vmatpush1.msra.mxu0 0.0
    %191 = vmatprep.subr.mxu0 0.0
    %192 = vmatpush1.msra.mxu0 0.0
    %193 = vmatprep.subr.mxu0 0.0
    %194 = vmatpush1.msra.mxu0 0.0
    %195 = vmatprep.subr.mxu0 0.0
    %196 = vmatpush1.msra.mxu0 0.0
    %197 = vmatprep.subr.mxu0 0.0
    %198 = vmatpush1.msra.mxu0 0.0
    %199 = vmatprep.subr.mxu0 0.0
    %200 = vmatpush1.msra.mxu0 0.0
    %201 = vmatprep.mubr.f32.mxu0 0.0
    %v202 = vand.u32 %v36, 4294901760
    %203 = vmatmul.mubr.f32.gmra.mrb[0].mxu0 %v202
    %v204 = vpop.f32.mrb[0].mxu0
    %v205 = vadd.f32 %v114, %v204
    %v206 = vpop.f32.mrb[0].mxu0
    %207 = vdwg.mxu0
    %208 = vmatprep.subr.mxu0 0.0
    %v209 = vand.u32 %v23, 4294901760
    %v210 = vsub.f32 %v23, %v209
    %211 = vmatpush1.msra.mxu0 %v210
    %212 = vmatprep.subr.mxu0 0.0
    %v213 = vand.u32 %v24, 4294901760
    %v214 = vsub.f32 %v24, %v213
    %215 = vmatpush1.msra.mxu0 %v214
    %216 = vmatprep.subr.mxu0 0.0
    %v217 = vand.u32 %v25, 4294901760
    %v218 = vsub.f32 %v25, %v217
    %219 = vmatpush1.msra.mxu0 %v218
    %220 = vmatprep.subr.mxu0 0.0
    %v221 = vand.u32 %v26, 4294901760
    %v222 = vsub.f32 %v26, %v221
    %223 = vmatpush1.msra.mxu0 %v222
    %224 = vmatprep.subr.mxu0 0.0
    %225 = vmatpush1.msra.mxu0 0.0
    %226 = vmatprep.subr.mxu0 0.0
    %227 = vmatpush1.msra.mxu0 0.0
    %228 = vmatprep.subr.mxu0 0.0
    %229 = vmatpush1.msra.mxu0 0.0
    %230 = vmatprep.subr.mxu0 0.0
    %231 = vmatpush1.msra.mxu0 0.0
    %232 = vmatprep.subr.mxu0 0.0
    %233 = vmatpush1.msra.mxu0 0.0
    %234 = vmatprep.subr.mxu0 0.0
    %235 = vmatpush1.msra.mxu0 0.0
    %236 = vmatprep.subr.mxu0 0.0
    %237 = vmatpush1.msra.mxu0 0.0
    %238 = vmatprep.subr.mxu0 0.0
    %239 = vmatpush1.msra.mxu0 0.0
    %240 = vmatprep.subr.mxu0 0.0
    %241 = vmatpush1.msra.mxu0 0.0
    %242 = vmatprep.subr.mxu0 0.0
    %243 = vmatpush1.msra.mxu0 0.0
    %244 = vmatprep.subr.mxu0 0.0
    %245 = vmatpush1.msra.mxu0 0.0
    %246 = vmatprep.subr.mxu0 0.0
    %247 = vmatpush1.msra.mxu0 0.0
    %248 = vmatprep.subr.mxu0 0.0
    %249 = vmatpush1.msra.mxu0 0.0
    %250 = vmatprep.subr.mxu0 0.0
    %251 = vmatpush1.msra.mxu0 0.0
    %252 = vmatprep.subr.mxu0 0.0
    %253 = vmatpush1.msra.mxu0 0.0
    %254 = vmatprep.subr.mxu0 0.0
    %255 = vmatpush1.msra.mxu0 0.0
    %256 = vmatprep.subr.mxu0 0.0
    %257 = vmatpush1.msra.mxu0 0.0
    %258 = vmatprep.subr.mxu0 0.0
    %259 = vmatpush1.msra.mxu0 0.0
    %260 = vmatprep.subr.mxu0 0.0
    %261 = vmatpush1.msra.mxu0 0.0
    %262 = vmatprep.subr.mxu0 0.0
    %263 = vmatpush1.msra.mxu0 0.0
    %264 = vmatprep.subr.mxu0 0.0
    %265 = vmatpush1.msra.mxu0 0.0
    %266 = vmatprep.subr.mxu0 0.0
    %267 = vmatpush1.msra.mxu0 0.0
    %268 = vmatprep.subr.mxu0 0.0
    %269 = vmatpush1.msra.mxu0 0.0
    %270 = vmatprep.subr.mxu0 0.0
    %271 = vmatpush1.msra.mxu0 0.0
    %272 = vmatprep.subr.mxu0 0.0
    %273 = vmatpush1.msra.mxu0 0.0
    %274 = vmatprep.subr.mxu0 0.0
    %275 = vmatpush1.msra.mxu0 0.0
    %276 = vmatprep.subr.mxu0 0.0
    %277 = vmatpush1.msra.mxu0 0.0
    %278 = vmatprep.subr.mxu0 0.0
    %279 = vmatpush1.msra.mxu0 0.0
    %280 = vmatprep.mubr.f32.mxu0 0.0
    %v281 = vand.u32 %v36, 4294901760
    %v282 = vsub.f32 %v36, %v281
    %283 = vmatmul.mubr.f32.gmra.mrb[0].mxu0 %v282
    %v284 = vpop.f32.mrb[0].mxu0
    %v285 = vadd.f32 %v205, %v284
    %v286 = vpop.f32.mrb[0].mxu0
    %287 = vdwg.mxu0
    %288 = vmatprep.subr.mxu0 0.0
    %v289 = vand.u32 %v23, 4294901760
    %290 = vmatpush1.msra.mxu0 %v289
    %291 = vmatprep.subr.mxu0 0.0
    %v292 = vand.u32 %v24, 4294901760
    %293 = vmatpush1.msra.mxu0 %v292
    %294 = vmatprep.subr.mxu0 0.0
    %v295 = vand.u32 %v25, 4294901760
    %296 = vmatpush1.msra.mxu0 %v295
    %297 = vmatprep.subr.mxu0 0.0
    %v298 = vand.u32 %v26, 4294901760
    %299 = vmatpush1.msra.mxu0 %v298
    %300 = vmatprep.subr.mxu0 0.0
    %301 = vmatpush1.msra.mxu0 0.0
    %302 = vmatprep.subr.mxu0 0.0
    %303 = vmatpush1.msra.mxu0 0.0
    %304 = vmatprep.subr.mxu0 0.0
    %305 = vmatpush1.msra.mxu0 0.0
    %306 = vmatprep.subr.mxu0 0.0
    %307 = vmatpush1.msra.mxu0 0.0
    %308 = vmatprep.subr.mxu0 0.0
    %309 = vmatpush1.msra.mxu0 0.0
    %310 = vmatprep.subr.mxu0 0.0
    %311 = vmatpush1.msra.mxu0 0.0
    %312 = vmatprep.subr.mxu0 0.0
    %313 = vmatpush1.msra.mxu0 0.0
    %314 = vmatprep.subr.mxu0 0.0
    %315 = vmatpush1.msra.mxu0 0.0
    %316 = vmatprep.subr.mxu0 0.0
    %317 = vmatpush1.msra.mxu0 0.0
    %318 = vmatprep.subr.mxu0 0.0
    %319 = vmatpush1.msra.mxu0 0.0
    %320 = vmatprep.subr.mxu0 0.0
    %321 = vmatpush1.msra.mxu0 0.0
    %322 = vmatprep.subr.mxu0 0.0
    %323 = vmatpush1.msra.mxu0 0.0
    %324 = vmatprep.subr.mxu0 0.0
    %325 = vmatpush1.msra.mxu0 0.0
    %326 = vmatprep.subr.mxu0 0.0
    %327 = vmatpush1.msra.mxu0 0.0
    %328 = vmatprep.subr.mxu0 0.0
    %329 = vmatpush1.msra.mxu0 0.0
    %330 = vmatprep.subr.mxu0 0.0
    %331 = vmatpush1.msra.mxu0 0.0
    %332 = vmatprep.subr.mxu0 0.0
    %333 = vmatpush1.msra.mxu0 0.0
    %334 = vmatprep.subr.mxu0 0.0
    %335 = vmatpush1.msra.mxu0 0.0
    %336 = vmatprep.subr.mxu0 0.0
    %337 = vmatpush1.msra.mxu0 0.0
    %338 = vmatprep.subr.mxu0 0.0
    %339 = vmatpush1.msra.mxu0 0.0
    %340 = vmatprep.subr.mxu0 0.0
    %341 = vmatpush1.msra.mxu0 0.0
    %342 = vmatprep.subr.mxu0 0.0
    %343 = vmatpush1.msra.mxu0 0.0
    %344 = vmatprep.subr.mxu0 0.0
    %345 = vmatpush1.msra.mxu0 0.0
    %346 = vmatprep.subr.mxu0 0.0
    %347 = vmatpush1.msra.mxu0 0.0
    %348 = vmatprep.subr.mxu0 0.0
    %349 = vmatpush1.msra.mxu0 0.0
    %350 = vmatprep.subr.mxu0 0.0
    %351 = vmatpush1.msra.mxu0 0.0
    %352 = vmatprep.subr.mxu0 0.0
    %353 = vmatpush1.msra.mxu0 0.0
    %354 = vmatprep.subr.mxu0 0.0
    %355 = vmatpush1.msra.mxu0 0.0
    %356 = vmatprep.mubr.f32.mxu0 0.0
    %v357 = vand.u32 %v36, 4294901760
    %v358 = vsub.f32 %v36, %v357
    %v359 = vand.u32 %v358, 4294901760
    %360 = vmatmul.mubr.f32.gmra.mrb[0].mxu0 %v359
    %v361 = vpop.f32.mrb[0].mxu0
    %v362 = vadd.f32 %v285, %v361
    %v363 = vpop.f32.mrb[0].mxu0
    %364 = vdwg.mxu0
    %365 = vmatprep.subr.mxu0 0.0
    %v366 = vand.u32 %v23, 4294901760
    %v367 = vsub.f32 %v23, %v366
    %v368 = vand.u32 %v367, 4294901760
    %369 = vmatpush1.msra.mxu0 %v368
    %370 = vmatprep.subr.mxu0 0.0
    %v371 = vand.u32 %v24, 4294901760
    %v372 = vsub.f32 %v24, %v371
    %v373 = vand.u32 %v372, 4294901760
    %374 = vmatpush1.msra.mxu0 %v373
    %375 = vmatprep.subr.mxu0 0.0
    %v376 = vand.u32 %v25, 4294901760
    %v377 = vsub.f32 %v25, %v376
    %v378 = vand.u32 %v377, 4294901760
    %379 = vmatpush1.msra.mxu0 %v378
    %380 = vmatprep.subr.mxu0 0.0
    %v381 = vand.u32 %v26, 4294901760
    %v382 = vsub.f32 %v26, %v381
    %v383 = vand.u32 %v382, 4294901760
    %384 = vmatpush1.msra.mxu0 %v383
    %385 = vmatprep.subr.mxu0 0.0
    %386 = vmatpush1.msra.mxu0 0.0
    %387 = vmatprep.subr.mxu0 0.0
    %388 = vmatpush1.msra.mxu0 0.0
    %389 = vmatprep.subr.mxu0 0.0
    %390 = vmatpush1.msra.mxu0 0.0
    %391 = vmatprep.subr.mxu0 0.0
    %392 = vmatpush1.msra.mxu0 0.0
    %393 = vmatprep.subr.mxu0 0.0
    %394 = vmatpush1.msra.mxu0 0.0
    %395 = vmatprep.subr.mxu0 0.0
    %396 = vmatpush1.msra.mxu0 0.0
    %397 = vmatprep.subr.mxu0 0.0
    %398 = vmatpush1.msra.mxu0 0.0
    %399 = vmatprep.subr.mxu0 0.0
    %400 = vmatpush1.msra.mxu0 0.0
    %401 = vmatprep.subr.mxu0 0.0
    %402 = vmatpush1.msra.mxu0 0.0
    %403 = vmatprep.subr.mxu0 0.0
    %404 = vmatpush1.msra.mxu0 0.0
    %405 = vmatprep.subr.mxu0 0.0
    %406 = vmatpush1.msra.mxu0 0.0
    %407 = vmatprep.subr.mxu0 0.0
    %408 = vmatpush1.msra.mxu0 0.0
    %409 = vmatprep.subr.mxu0 0.0
    %410 = vmatpush1.msra.mxu0 0.0
    %411 = vmatprep.subr.mxu0 0.0
    %412 = vmatpush1.msra.mxu0 0.0
    %413 = vmatprep.subr.mxu0 0.0
    %414 = vmatpush1.msra.mxu0 0.0
    %415 = vmatprep.subr.mxu0 0.0
    %416 = vmatpush1.msra.mxu0 0.0
    %417 = vmatprep.subr.mxu0 0.0
    %418 = vmatpush1.msra.mxu0 0.0
    %419 = vmatprep.subr.mxu0 0.0
    %420 = vmatpush1.msra.mxu0 0.0
    %421 = vmatprep.subr.mxu0 0.0
    %422 = vmatpush1.msra.mxu0 0.0
    %423 = vmatprep.subr.mxu0 0.0
    %424 = vmatpush1.msra.mxu0 0.0
    %425 = vmatprep.subr.mxu0 0.0
    %426 = vmatpush1.msra.mxu0 0.0
    %427 = vmatprep.subr.mxu0 0.0
    %428 = vmatpush1.msra.mxu0 0.0
    %429 = vmatprep.subr.mxu0 0.0
    %430 = vmatpush1.msra.mxu0 0.0
    %431 = vmatprep.subr.mxu0 0.0
    %432 = vmatpush1.msra.mxu0 0.0
    %433 = vmatprep.subr.mxu0 0.0
    %434 = vmatpush1.msra.mxu0 0.0
    %435 = vmatprep.subr.mxu0 0.0
    %436 = vmatpush1.msra.mxu0 0.0
    %437 = vmatprep.subr.mxu0 0.0
    %438 = vmatpush1.msra.mxu0 0.0
    %439 = vmatprep.subr.mxu0 0.0
    %440 = vmatpush1.msra.mxu0 0.0
    %441 = vmatprep.mubr.f32.mxu0 0.0
    %v442 = vand.u32 %v36, 4294901760
    %443 = vmatmul.mubr.f32.gmra.mrb[0].mxu0 %v442
    %v444 = vpop.f32.mrb[0].mxu0
    %v445 = vadd.f32 %v362, %v444
    %v446 = vpop.f32.mrb[0].mxu0
    %447 = vdwg.mxu0
    %448 = vmatprep.subr.mxu0 0.0
    %v449 = vand.u32 %v23, 4294901760
    %450 = vmatpush1.msra.mxu0 %v449
    %451 = vmatprep.subr.mxu0 0.0
    %v452 = vand.u32 %v24, 4294901760
    %453 = vmatpush1.msra.mxu0 %v452
    %454 = vmatprep.subr.mxu0 0.0
    %v455 = vand.u32 %v25, 4294901760
    %456 = vmatpush1.msra.mxu0 %v455
    %457 = vmatprep.subr.mxu0 0.0
    %v458 = vand.u32 %v26, 4294901760
    %459 = vmatpush1.msra.mxu0 %v458
    %460 = vmatprep.subr.mxu0 0.0
    %461 = vmatpush1.msra.mxu0 0.0
    %462 = vmatprep.subr.mxu0 0.0
    %463 = vmatpush1.msra.mxu0 0.0
    %464 = vmatprep.subr.mxu0 0.0
    %465 = vmatpush1.msra.mxu0 0.0
    %466 = vmatprep.subr.mxu0 0.0
    %467 = vmatpush1.msra.mxu0 0.0
    %468 = vmatprep.subr.mxu0 0.0
    %469 = vmatpush1.msra.mxu0 0.0
    %470 = vmatprep.subr.mxu0 0.0
    %471 = vmatpush1.msra.mxu0 0.0
    %472 = vmatprep.subr.mxu0 0.0
    %473 = vmatpush1.msra.mxu0 0.0
    %474 = vmatprep.subr.mxu0 0.0
    %475 = vmatpush1.msra.mxu0 0.0
    %476 = vmatprep.subr.mxu0 0.0
    %477 = vmatpush1.msra.mxu0 0.0
    %478 = vmatprep.subr.mxu0 0.0
    %479 = vmatpush1.msra.mxu0 0.0
    %480 = vmatprep.subr.mxu0 0.0
    %481 = vmatpush1.msra.mxu0 0.0
    %482 = vmatprep.subr.mxu0 0.0
    %483 = vmatpush1.msra.mxu0 0.0
    %484 = vmatprep.subr.mxu0 0.0
    %485 = vmatpush1.msra.mxu0 0.0
    %486 = vmatprep.subr.mxu0 0.0
    %487 = vmatpush1.msra.mxu0 0.0
    %488 = vmatprep.subr.mxu0 0.0
    %489 = vmatpush1.msra.mxu0 0.0
    %490 = vmatprep.subr.mxu0 0.0
    %491 = vmatpush1.msra.mxu0 0.0
    %492 = vmatprep.subr.mxu0 0.0
    %493 = vmatpush1.msra.mxu0 0.0
    %494 = vmatprep.subr.mxu0 0.0
    %495 = vmatpush1.msra.mxu0 0.0
    %496 = vmatprep.subr.mxu0 0.0
    %497 = vmatpush1.msra.mxu0 0.0
    %498 = vmatprep.subr.mxu0 0.0
    %499 = vmatpush1.msra.mxu0 0.0
    %500 = vmatprep.subr.mxu0 0.0
    %501 = vmatpush1.msra.mxu0 0.0
    %502 = vmatprep.subr.mxu0 0.0
    %503 = vmatpush1.msra.mxu0 0.0
    %504 = vmatprep.subr.mxu0 0.0
    %505 = vmatpush1.msra.mxu0 0.0
    %506 = vmatprep.subr.mxu0 0.0
    %507 = vmatpush1.msra.mxu0 0.0
    %508 = vmatprep.subr.mxu0 0.0
    %509 = vmatpush1.msra.mxu0 0.0
    %510 = vmatprep.subr.mxu0 0.0
    %511 = vmatpush1.msra.mxu0 0.0
    %512 = vmatprep.subr.mxu0 0.0
    %513 = vmatpush1.msra.mxu0 0.0
    %514 = vmatprep.subr.mxu0 0.0
    %515 = vmatpush1.msra.mxu0 0.0
    %516 = vmatprep.mubr.f32.mxu0 0.0
    %v517 = vand.u32 %v36, 4294901760
    %518 = vmatmul.mubr.f32.gmra.mrb[0].mxu0 %v517
    %v519 = vpop.f32.mrb[0].mxu0
    %v520 = vadd.f32 %v445, %v519
    %v521 = vpop.f32.mrb[0].mxu0
    %522 = vdwg.mxu0
    %v523 = vmax.f32 %v520, 0.0
    %v524 = vld [vmem:[%s3] sm:$0x1]
    %s525 = sld [smem:[#allocation2]]
    %v526 = vstv %s525
    %vm527 = vcmask 130048
    %v529 = vsel %vm527, %v524, 0
    %v532 = vsel %vm527, %v523, 0
    %534 = vmatprep.subr.mxu0 0.0
    %v535 = vand.u32 %v532, 4294901760
    %536 = vmatpush1.xpose.msra.mxu0 %v535
    %537 = vmatprep.subr.mxu0 0.0
    %538 = vmatpush1.xpose.msra.mxu0 0.0
    %539 = vmatprep.subr.mxu0 0.0
    %540 = vmatpush1.xpose.msra.mxu0 0.0
    %541 = vmatprep.subr.mxu0 0.0
    %542 = vmatpush1.xpose.msra.mxu0 0.0
    %543 = vmatprep.subr.mxu0 0.0
    %544 = vmatpush1.xpose.msra.mxu0 0.0
    %545 = vmatprep.subr.mxu0 0.0
    %546 = vmatpush1.xpose.msra.mxu0 0.0
    %547 = vmatprep.subr.mxu0 0.0
    %548 = vmatpush1.xpose.msra.mxu0 0.0
    %549 = vmatprep.subr.mxu0 0.0
    %550 = vmatpush1.xpose.msra.mxu0 0.0
    %551 = vmatprep.subr.mxu0 0.0
    %552 = vmatpush1.xpose.msra.mxu0 0.0
    %553 = vmatprep.subr.mxu0 0.0
    %554 = vmatpush1.xpose.msra.mxu0 0.0
    %555 = vmatprep.subr.mxu0 0.0
    %556 = vmatpush1.xpose.msra.mxu0 0.0
    %557 = vmatprep.subr.mxu0 0.0
    %558 = vmatpush1.xpose.msra.mxu0 0.0
    %559 = vmatprep.subr.mxu0 0.0
    %560 = vmatpush1.xpose.msra.mxu0 0.0
    %561 = vmatprep.subr.mxu0 0.0
    %562 = vmatpush1.xpose.msra.mxu0 0.0
    %563 = vmatprep.subr.mxu0 0.0
    %564 = vmatpush1.xpose.msra.mxu0 0.0
    %565 = vmatprep.subr.mxu0 0.0
    %566 = vmatpush1.xpose.msra.mxu0 0.0
    %567 = vmatprep.subr.mxu0 0.0
    %568 = vmatpush1.xpose.msra.mxu0 0.0
    %569 = vmatprep.subr.mxu0 0.0
    %570 = vmatpush1.xpose.msra.mxu0 0.0
    %571 = vmatprep.subr.mxu0 0.0
    %572 = vmatpush1.xpose.msra.mxu0 0.0
    %573 = vmatprep.subr.mxu0 0.0
    %574 = vmatpush1.xpose.msra.mxu0 0.0
    %575 = vmatprep.subr.mxu0 0.0
    %576 = vmatpush1.xpose.msra.mxu0 0.0
    %577 = vmatprep.subr.mxu0 0.0
    %578 = vmatpush1.xpose.msra.mxu0 0.0
    %579 = vmatprep.subr.mxu0 0.0
    %580 = vmatpush1.xpose.msra.mxu0 0.0
    %581 = vmatprep.subr.mxu0 0.0
    %582 = vmatpush1.xpose.msra.mxu0 0.0
    %583 = vmatprep.subr.mxu0 0.0
    %584 = vmatpush1.xpose.msra.mxu0 0.0
    %585 = vmatprep.subr.mxu0 0.0
    %586 = vmatpush1.xpose.msra.mxu0 0.0
    %587 = vmatprep.subr.mxu0 0.0
    %588 = vmatpush1.xpose.msra.mxu0 0.0
    %589 = vmatprep.subr.mxu0 0.0
    %590 = vmatpush1.xpose.msra.mxu0 0.0
    %591 = vmatprep.subr.mxu0 0.0
    %592 = vmatpush1.xpose.msra.mxu0 0.0
    %593 = vmatprep.subr.mxu0 0.0
    %594 = vmatpush1.xpose.msra.mxu0 0.0
    %595 = vmatprep.subr.mxu0 0.0
    %596 = vmatpush1.xpose.msra.mxu0 0.0
    %597 = vmatprep.subr.mxu0 0.0
    %598 = vmatpush1.xpose.msra.mxu0 0.0
    %599 = vmatprep.mubr.f32.mxu0 0.0
    %v600 = vand.u32 %v529, 4294901760
    %v601 = vsub.f32 %v529, %v600
    %v602 = vand.u32 %v601, 4294901760
    %v603 = vsub.f32 %v601, %v602
    %v604 = vand.u32 %v603, 4294901760
    %605 = vmatmul.mubr.f32.gmra.mrb[0].mxu0 %v604
    %v606 = vpop.f32.mrb[0].mxu0
    %v607 = vadd.f32 %v526, %v606
    %v608 = vpop.f32.mrb[0].mxu0
    %609 = vdwg.mxu0
    %610 = vmatprep.subr.mxu0 0.0
    %v611 = vand.u32 %v532, 4294901760
    %v612 = vsub.f32 %v532, %v611
    %v613 = vand.u32 %v612, 4294901760
    %v614 = vsub.f32 %v612, %v613
    %v615 = vand.u32 %v614, 4294901760
    %616 = vmatpush1.xpose.msra.mxu0 %v615
    %617 = vmatprep.subr.mxu0 0.0
    %618 = vmatpush1.xpose.msra.mxu0 0.0
    %619 = vmatprep.subr.mxu0 0.0
    %620 = vmatpush1.xpose.msra.mxu0 0.0
    %621 = vmatprep.subr.mxu0 0.0
    %622 = vmatpush1.xpose.msra.mxu0 0.0
    %623 = vmatprep.subr.mxu0 0.0
    %624 = vmatpush1.xpose.msra.mxu0 0.0
    %625 = vmatprep.subr.mxu0 0.0
    %626 = vmatpush1.xpose.msra.mxu0 0.0
    %627 = vmatprep.subr.mxu0 0.0
    %628 = vmatpush1.xpose.msra.mxu0 0.0
    %629 = vmatprep.subr.mxu0 0.0
    %630 = vmatpush1.xpose.msra.mxu0 0.0
    %631 = vmatprep.subr.mxu0 0.0
    %632 = vmatpush1.xpose.msra.mxu0 0.0
    %633 = vmatprep.subr.mxu0 0.0
    %634 = vmatpush1.xpose.msra.mxu0 0.0
    %635 = vmatprep.subr.mxu0 0.0
    %636 = vmatpush1.xpose.msra.mxu0 0.0
    %637 = vmatprep.subr.mxu0 0.0
    %638 = vmatpush1.xpose.msra.mxu0 0.0
    %639 = vmatprep.subr.mxu0 0.0
    %640 = vmatpush1.xpose.msra.mxu0 0.0
    %641 = vmatprep.subr.mxu0 0.0
    %642 = vmatpush1.xpose.msra.mxu0 0.0
    %643 = vmatprep.subr.mxu0 0.0
    %644 = vmatpush1.xpose.msra.mxu0 0.0
    %645 = vmatprep.subr.mxu0 0.0
    %646 = vmatpush1.xpose.msra.mxu0 0.0
    %647 = vmatprep.subr.mxu0 0.0
    %648 = vmatpush1.xpose.msra.mxu0 0.0
    %649 = vmatprep.subr.mxu0 0.0
    %650 = vmatpush1.xpose.msra.mxu0 0.0
    %651 = vmatprep.subr.mxu0 0.0
    %652 = vmatpush1.xpose.msra.mxu0 0.0
    %653 = vmatprep.subr.mxu0 0.0
    %654 = vmatpush1.xpose.msra.mxu0 0.0
    %655 = vmatprep.subr.mxu0 0.0
    %656 = vmatpush1.xpose.msra.mxu0 0.0
    %657 = vmatprep.subr.mxu0 0.0
    %658 = vmatpush1.xpose.msra.mxu0 0.0
    %659 = vmatprep.subr.mxu0 0.0
    %660 = vmatpush1.xpose.msra.mxu0 0.0
    %661 = vmatprep.subr.mxu0 0.0
    %662 = vmatpush1.xpose.msra.mxu0 0.0
    %663 = vmatprep.subr.mxu0 0.0
    %664 = vmatpush1.xpose.msra.mxu0 0.0
    %665 = vmatprep.subr.mxu0 0.0
    %666 = vmatpush1.xpose.msra.mxu0 0.0
    %667 = vmatprep.subr.mxu0 0.0
    %668 = vmatpush1.xpose.msra.mxu0 0.0
    %669 = vmatprep.subr.mxu0 0.0
    %670 = vmatpush1.xpose.msra.mxu0 0.0
    %671 = vmatprep.subr.mxu0 0.0
    %672 = vmatpush1.xpose.msra.mxu0 0.0
    %673 = vmatprep.subr.mxu0 0.0
    %674 = vmatpush1.xpose.msra.mxu0 0.0
    %675 = vmatprep.subr.mxu0 0.0
    %676 = vmatpush1.xpose.msra.mxu0 0.0
    %677 = vmatprep.subr.mxu0 0.0
    %678 = vmatpush1.xpose.msra.mxu0 0.0
    %679 = vmatprep.mubr.f32.mxu0 0.0
    %v680 = vand.u32 %v529, 4294901760
    %681 = vmatmul.mubr.f32.gmra.mrb[0].mxu0 %v680
    %v682 = vpop.f32.mrb[0].mxu0
    %v683 = vadd.f32 %v607, %v682
    %v684 = vpop.f32.mrb[0].mxu0
    %685 = vdwg.mxu0
    %686 = vmatprep.subr.mxu0 0.0
    %v687 = vand.u32 %v532, 4294901760
    %v688 = vsub.f32 %v532, %v687
    %689 = vmatpush1.xpose.msra.mxu0 %v688
    %690 = vmatprep.subr.mxu0 0.0
    %691 = vmatpush1.xpose.msra.mxu0 0.0
    %692 = vmatprep.subr.mxu0 0.0
    %693 = vmatpush1.xpose.msra.mxu0 0.0
    %694 = vmatprep.subr.mxu0 0.0
    %695 = vmatpush1.xpose.msra.mxu0 0.0
    %696 = vmatprep.subr.mxu0 0.0
    %697 = vmatpush1.xpose.msra.mxu0 0.0
    %698 = vmatprep.subr.mxu0 0.0
    %699 = vmatpush1.xpose.msra.mxu0 0.0
    %700 = vmatprep.subr.mxu0 0.0
    %701 = vmatpush1.xpose.msra.mxu0 0.0
    %702 = vmatprep.subr.mxu0 0.0
    %703 = vmatpush1.xpose.msra.mxu0 0.0
    %704 = vmatprep.subr.mxu0 0.0
    %705 = vmatpush1.xpose.msra.mxu0 0.0
    %706 = vmatprep.subr.mxu0 0.0
    %707 = vmatpush1.xpose.msra.mxu0 0.0
    %708 = vmatprep.subr.mxu0 0.0
    %709 = vmatpush1.xpose.msra.mxu0 0.0
    %710 = vmatprep.subr.mxu0 0.0
    %711 = vmatpush1.xpose.msra.mxu0 0.0
    %712 = vmatprep.subr.mxu0 0.0
    %713 = vmatpush1.xpose.msra.mxu0 0.0
    %714 = vmatprep.subr.mxu0 0.0
    %715 = vmatpush1.xpose.msra.mxu0 0.0
    %716 = vmatprep.subr.mxu0 0.0
    %717 = vmatpush1.xpose.msra.mxu0 0.0
    %718 = vmatprep.subr.mxu0 0.0
    %719 = vmatpush1.xpose.msra.mxu0 0.0
    %720 = vmatprep.subr.mxu0 0.0
    %721 = vmatpush1.xpose.msra.mxu0 0.0
    %722 = vmatprep.subr.mxu0 0.0
    %723 = vmatpush1.xpose.msra.mxu0 0.0
    %724 = vmatprep.subr.mxu0 0.0
    %725 = vmatpush1.xpose.msra.mxu0 0.0
    %726 = vmatprep.subr.mxu0 0.0
    %727 = vmatpush1.xpose.msra.mxu0 0.0
    %728 = vmatprep.subr.mxu0 0.0
    %729 = vmatpush1.xpose.msra.mxu0 0.0
    %730 = vmatprep.subr.mxu0 0.0
    %731 = vmatpush1.xpose.msra.mxu0 0.0
    %732 = vmatprep.subr.mxu0 0.0
    %733 = vmatpush1.xpose.msra.mxu0 0.0
    %734 = vmatprep.subr.mxu0 0.0
    %735 = vmatpush1.xpose.msra.mxu0 0.0
    %736 = vmatprep.subr.mxu0 0.0
    %737 = vmatpush1.xpose.msra.mxu0 0.0
    %738 = vmatprep.subr.mxu0 0.0
    %739 = vmatpush1.xpose.msra.mxu0 0.0
    %740 = vmatprep.subr.mxu0 0.0
    %741 = vmatpush1.xpose.msra.mxu0 0.0
    %742 = vmatprep.subr.mxu0 0.0
    %743 = vmatpush1.xpose.msra.mxu0 0.0
    %744 = vmatprep.subr.mxu0 0.0
    %745 = vmatpush1.xpose.msra.mxu0 0.0
    %746 = vmatprep.subr.mxu0 0.0
    %747 = vmatpush1.xpose.msra.mxu0 0.0
    %748 = vmatprep.subr.mxu0 0.0
    %749 = vmatpush1.xpose.msra.mxu0 0.0
    %750 = vmatprep.subr.mxu0 0.0
    %751 = vmatpush1.xpose.msra.mxu0 0.0
    %752 = vmatprep.mubr.f32.mxu0 0.0
    %v753 = vand.u32 %v529, 4294901760
    %v754 = vsub.f32 %v529, %v753
    %755 = vmatmul.mubr.f32.gmra.mrb[0].mxu0 %v754
    %v756 = vpop.f32.mrb[0].mxu0
    %v757 = vadd.f32 %v683, %v756
    %v758 = vpop.f32.mrb[0].mxu0
    %759 = vdwg.mxu0
    %760 = vmatprep.subr.mxu0 0.0
    %v761 = vand.u32 %v532, 4294901760
    %762 = vmatpush1.xpose.msra.mxu0 %v761
    %763 = vmatprep.subr.mxu0 0.0
    %764 = vmatpush1.xpose.msra.mxu0 0.0
    %765 = vmatprep.subr.mxu0 0.0
    %766 = vmatpush1.xpose.msra.mxu0 0.0
    %767 = vmatprep.subr.mxu0 0.0
    %768 = vmatpush1.xpose.msra.mxu0 0.0
    %769 = vmatprep.subr.mxu0 0.0
    %770 = vmatpush1.xpose.msra.mxu0 0.0
    %771 = vmatprep.subr.mxu0 0.0
    %772 = vmatpush1.xpose.msra.mxu0 0.0
    %773 = vmatprep.subr.mxu0 0.0
    %774 = vmatpush1.xpose.msra.mxu0 0.0
    %775 = vmatprep.subr.mxu0 0.0
    %776 = vmatpush1.xpose.msra.mxu0 0.0
    %777 = vmatprep.subr.mxu0 0.0
    %778 = vmatpush1.xpose.msra.mxu0 0.0
    %779 = vmatprep.subr.mxu0 0.0
    %780 = vmatpush1.xpose.msra.mxu0 0.0
    %781 = vmatprep.subr.mxu0 0.0
    %782 = vmatpush1.xpose.msra.mxu0 0.0
    %783 = vmatprep.subr.mxu0 0.0
    %784 = vmatpush1.xpose.msra.mxu0 0.0
    %785 = vmatprep.subr.mxu0 0.0
    %786 = vmatpush1.xpose.msra.mxu0 0.0
    %787 = vmatprep.subr.mxu0 0.0
    %788 = vmatpush1.xpose.msra.mxu0 0.0
    %789 = vmatprep.subr.mxu0 0.0
    %790 = vmatpush1.xpose.msra.mxu0 0.0
    %791 = vmatprep.subr.mxu0 0.0
    %792 = vmatpush1.xpose.msra.mxu0 0.0
    %793 = vmatprep.subr.mxu0 0.0
    %794 = vmatpush1.xpose.msra.mxu0 0.0
    %795 = vmatprep.subr.mxu0 0.0
    %796 = vmatpush1.xpose.msra.mxu0 0.0
    %797 = vmatprep.subr.mxu0 0.0
    %798 = vmatpush1.xpose.msra.mxu0 0.0
    %799 = vmatprep.subr.mxu0 0.0
    %800 = vmatpush1.xpose.msra.mxu0 0.0
    %801 = vmatprep.subr.mxu0 0.0
    %802 = vmatpush1.xpose.msra.mxu0 0.0
    %803 = vmatprep.subr.mxu0 0.0
    %804 = vmatpush1.xpose.msra.mxu0 0.0
    %805 = vmatprep.subr.mxu0 0.0
    %806 = vmatpush1.xpose.msra.mxu0 0.0
    %807 = vmatprep.subr.mxu0 0.0
    %808 = vmatpush1.xpose.msra.mxu0 0.0
    %809 = vmatprep.subr.mxu0 0.0
    %810 = vmatpush1.xpose.msra.mxu0 0.0
    %811 = vmatprep.subr.mxu0 0.0
    %812 = vmatpush1.xpose.msra.mxu0 0.0
    %813 = vmatprep.subr.mxu0 0.0
    %814 = vmatpush1.xpose.msra.mxu0 0.0
    %815 = vmatprep.subr.mxu0 0.0
    %816 = vmatpush1.xpose.msra.mxu0 0.0
    %817 = vmatprep.subr.mxu0 0.0
    %818 = vmatpush1.xpose.msra.mxu0 0.0
    %819 = vmatprep.subr.mxu0 0.0
    %820 = vmatpush1.xpose.msra.mxu0 0.0
    %821 = vmatprep.subr.mxu0 0.0
    %822 = vmatpush1.xpose.msra.mxu0 0.0
    %823 = vmatprep.subr.mxu0 0.0
    %824 = vmatpush1.xpose.msra.mxu0 0.0
    %825 = vmatprep.mubr.f32.mxu0 0.0
    %v826 = vand.u32 %v529, 4294901760
    %v827 = vsub.f32 %v529, %v826
    %v828 = vand.u32 %v827, 4294901760
    %829 = vmatmul.mubr.f32.gmra.mrb[0].mxu0 %v828
    %v830 = vpop.f32.mrb[0].mxu0
    %v831 = vadd.f32 %v757, %v830
    %v832 = vpop.f32.mrb[0].mxu0
    %833 = vdwg.mxu0
    %834 = vmatprep.subr.mxu0 0.0
    %v835 = vand.u32 %v532, 4294901760
    %v836 = vsub.f32 %v532, %v835
    %v837 = vand.u32 %v836, 4294901760
    %838 = vmatpush1.xpose.msra.mxu0 %v837
    %839 = vmatprep.subr.mxu0 0.0
    %840 = vmatpush1.xpose.msra.mxu0 0.0
    %841 = vmatprep.subr.mxu0 0.0
    %842 = vmatpush1.xpose.msra.mxu0 0.0
    %843 = vmatprep.subr.mxu0 0.0
    %844 = vmatpush1.xpose.msra.mxu0 0.0
    %845 = vmatprep.subr.mxu0 0.0
    %846 = vmatpush1.xpose.msra.mxu0 0.0
    %847 = vmatprep.subr.mxu0 0.0
    %848 = vmatpush1.xpose.msra.mxu0 0.0
    %849 = vmatprep.subr.mxu0 0.0
    %850 = vmatpush1.xpose.msra.mxu0 0.0
    %851 = vmatprep.subr.mxu0 0.0
    %852 = vmatpush1.xpose.msra.mxu0 0.0
    %853 = vmatprep.subr.mxu0 0.0
    %854 = vmatpush1.xpose.msra.mxu0 0.0
    %855 = vmatprep.subr.mxu0 0.0
    %856 = vmatpush1.xpose.msra.mxu0 0.0
    %857 = vmatprep.subr.mxu0 0.0
    %858 = vmatpush1.xpose.msra.mxu0 0.0
    %859 = vmatprep.subr.mxu0 0.0
    %860 = vmatpush1.xpose.msra.mxu0 0.0
    %861 = vmatprep.subr.mxu0 0.0
    %862 = vmatpush1.xpose.msra.mxu0 0.0
    %863 = vmatprep.subr.mxu0 0.0
    %864 = vmatpush1.xpose.msra.mxu0 0.0
    %865 = vmatprep.subr.mxu0 0.0
    %866 = vmatpush1.xpose.msra.mxu0 0.0
    %867 = vmatprep.subr.mxu0 0.0
    %868 = vmatpush1.xpose.msra.mxu0 0.0
    %869 = vmatprep.subr.mxu0 0.0
    %870 = vmatpush1.xpose.msra.mxu0 0.0
    %871 = vmatprep.subr.mxu0 0.0
    %872 = vmatpush1.xpose.msra.mxu0 0.0
    %873 = vmatprep.subr.mxu0 0.0
    %874 = vmatpush1.xpose.msra.mxu0 0.0
    %875 = vmatprep.subr.mxu0 0.0
    %876 = vmatpush1.xpose.msra.mxu0 0.0
    %877 = vmatprep.subr.mxu0 0.0
    %878 = vmatpush1.xpose.msra.mxu0 0.0
    %879 = vmatprep.subr.mxu0 0.0
    %880 = vmatpush1.xpose.msra.mxu0 0.0
    %881 = vmatprep.subr.mxu0 0.0
    %882 = vmatpush1.xpose.msra.mxu0 0.0
    %883 = vmatprep.subr.mxu0 0.0
    %884 = vmatpush1.xpose.msra.mxu0 0.0
    %885 = vmatprep.subr.mxu0 0.0
    %886 = vmatpush1.xpose.msra.mxu0 0.0
    %887 = vmatprep.subr.mxu0 0.0
    %888 = vmatpush1.xpose.msra.mxu0 0.0
    %889 = vmatprep.subr.mxu0 0.0
    %890 = vmatpush1.xpose.msra.mxu0 0.0
    %891 = vmatprep.subr.mxu0 0.0
    %892 = vmatpush1.xpose.msra.mxu0 0.0
    %893 = vmatprep.subr.mxu0 0.0
    %894 = vmatpush1.xpose.msra.mxu0 0.0
    %895 = vmatprep.subr.mxu0 0.0
    %896 = vmatpush1.xpose.msra.mxu0 0.0
    %897 = vmatprep.subr.mxu0 0.0
    %898 = vmatpush1.xpose.msra.mxu0 0.0
    %899 = vmatprep.subr.mxu0 0.0
    %900 = vmatpush1.xpose.msra.mxu0 0.0
    %901 = vmatprep.mubr.f32.mxu0 0.0
    %v902 = vand.u32 %v529, 4294901760
    %903 = vmatmul.mubr.f32.gmra.mrb[0].mxu0 %v902
    %v904 = vpop.f32.mrb[0].mxu0
    %v905 = vadd.f32 %v831, %v904
    %v906 = vpop.f32.mrb[0].mxu0
    %907 = vdwg.mxu0
    %908 = vmatprep.subr.mxu0 0.0
    %v909 = vand.u32 %v532, 4294901760
    %910 = vmatpush1.xpose.msra.mxu0 %v909
    %911 = vmatprep.subr.mxu0 0.0
    %912 = vmatpush1.xpose.msra.mxu0 0.0
    %913 = vmatprep.subr.mxu0 0.0
    %914 = vmatpush1.xpose.msra.mxu0 0.0
    %915 = vmatprep.subr.mxu0 0.0
    %916 = vmatpush1.xpose.msra.mxu0 0.0
    %917 = vmatprep.subr.mxu0 0.0
    %918 = vmatpush1.xpose.msra.mxu0 0.0
    %919 = vmatprep.subr.mxu0 0.0
    %920 = vmatpush1.xpose.msra.mxu0 0.0
    %921 = vmatprep.subr.mxu0 0.0
    %922 = vmatpush1.xpose.msra.mxu0 0.0
    %923 = vmatprep.subr.mxu0 0.0
    %924 = vmatpush1.xpose.msra.mxu0 0.0
    %925 = vmatprep.subr.mxu0 0.0
    %926 = vmatpush1.xpose.msra.mxu0 0.0
    %927 = vmatprep.subr.mxu0 0.0
    %928 = vmatpush1.xpose.msra.mxu0 0.0
    %929 = vmatprep.subr.mxu0 0.0
    %930 = vmatpush1.xpose.msra.mxu0 0.0
    %931 = vmatprep.subr.mxu0 0.0
    %932 = vmatpush1.xpose.msra.mxu0 0.0
    %933 = vmatprep.subr.mxu0 0.0
    %934 = vmatpush1.xpose.msra.mxu0 0.0
    %935 = vmatprep.subr.mxu0 0.0
    %936 = vmatpush1.xpose.msra.mxu0 0.0
    %937 = vmatprep.subr.mxu0 0.0
    %938 = vmatpush1.xpose.msra.mxu0 0.0
    %939 = vmatprep.subr.mxu0 0.0
    %940 = vmatpush1.xpose.msra.mxu0 0.0
    %941 = vmatprep.subr.mxu0 0.0
    %942 = vmatpush1.xpose.msra.mxu0 0.0
    %943 = vmatprep.subr.mxu0 0.0
    %944 = vmatpush1.xpose.msra.mxu0 0.0
    %945 = vmatprep.subr.mxu0 0.0
    %946 = vmatpush1.xpose.msra.mxu0 0.0
    %947 = vmatprep.subr.mxu0 0.0
    %948 = vmatpush1.xpose.msra.mxu0 0.0
    %949 = vmatprep.subr.mxu0 0.0
    %950 = vmatpush1.xpose.msra.mxu0 0.0
    %951 = vmatprep.subr.mxu0 0.0
    %952 = vmatpush1.xpose.msra.mxu0 0.0
    %953 = vmatprep.subr.mxu0 0.0
    %954 = vmatpush1.xpose.msra.mxu0 0.0
    %955 = vmatprep.subr.mxu0 0.0
    %956 = vmatpush1.xpose.msra.mxu0 0.0
    %957 = vmatprep.subr.mxu0 0.0
    %958 = vmatpush1.xpose.msra.mxu0 0.0
    %959 = vmatprep.subr.mxu0 0.0
    %960 = vmatpush1.xpose.msra.mxu0 0.0
    %961 = vmatprep.subr.mxu0 0.0
    %962 = vmatpush1.xpose.msra.mxu0 0.0
    %963 = vmatprep.subr.mxu0 0.0
    %964 = vmatpush1.xpose.msra.mxu0 0.0
    %965 = vmatprep.subr.mxu0 0.0
    %966 = vmatpush1.xpose.msra.mxu0 0.0
    %967 = vmatprep.subr.mxu0 0.0
    %968 = vmatpush1.xpose.msra.mxu0 0.0
    %969 = vmatprep.subr.mxu0 0.0
    %970 = vmatpush1.xpose.msra.mxu0 0.0
    %971 = vmatprep.subr.mxu0 0.0
    %972 = vmatpush1.xpose.msra.mxu0 0.0
    %973 = vmatprep.mubr.f32.mxu0 0.0
    %v974 = vand.u32 %v529, 4294901760
    %975 = vmatmul.mubr.f32.gmra.mrb[0].mxu0 %v974
    %v976 = vpop.f32.mrb[0].mxu0
    %v977 = vadd.f32 %v905, %v976
    %v978 = vpop.f32.mrb[0].mxu0
    %979 = vdwg.mxu0
    %vm980 = vcmask 57344
    %981 = vst.msk [vmem:[#allocation3] sm:$0x1] %vm980, %v977
    // Predicated region
    $region22: #{tpu_custom_call.1} parent=1 // pred_check
      _
    $region23: #{tpu_custom_call.1} parent=1 // pred_check_branch
      %983 = sbr.rel (0) target = $region25
    $region24: #{tpu_custom_call.1} parent=1 // pred_region
      %s985 = ssub.s32 16, 16
      %986 = vsyncadd [#allocation4], %s985
      %s988 = sshll.u32 [#allocation3], 4
      %s989 = int_to_ptr.vmem [resolvable:$true] %s988
      %991 = dma.vmem_to_hbm [thread:$0]  %s989, 16, %s5, [#allocation4]
    $region25: #{tpu_custom_call.1} parent=1 // pred_fallthru
      _
    // Predicated region
    $region26: #{tpu_custom_call.1} parent=1 // pred_check
      _
    $region27: #{tpu_custom_call.1} parent=1 // pred_check_branch
      %993 = sbr.rel (0) target = $region29
    $region28: #{tpu_custom_call.1} parent=1 // pred_region
      %994 = dma.done [#allocation4], 16
    $region29: #{tpu_custom_call.1} parent=1 // pred_fallthru
      _
    %995 = vsyncpa [#allocation4], 1

</llo_original>
